<compile_context>
chip_gen: v5e
topology: v5e:2x2
jax: 0.10.0
libtpu: 0.0.40
codegen_flags: <defaults>
</compile_context>

<pallas_src>
import functools
import math

import jax
import jax.numpy as jnp
from jax import lax
from jax.experimental import pallas as pl
from jax.experimental.pallas import tpu as pltpu

_KC = 16  # K-chunk size: one full bf16 sublane group, so chunk starts stay aligned.


def _meta_upscale_kernel(cols_ref, w_ref, o_ref):
    """Per-pixel contraction over K for one (q-tile, sub-pixel p) grid step.

    cols_ref: (N, Kp, TQ)    bf16 im2col patches (resident across the p axis)
    w_ref:    (1, 3, Kp, TQ) bf16 per-pixel meta weights for sub-pixel p
    o_ref:    (N, 1, 3, TQ)  f32 output RGB block
    """
    n_batch = cols_ref.shape[0]
    kp = cols_ref.shape[1]
    tq = cols_ref.shape[2]
    n_chunks = kp // _KC

    for n in range(n_batch):  # N is small and static; weights reused from VMEM.
        def body(kc, acc):
            k0 = pl.multiple_of(kc * _KC, _KC)
            c = cols_ref[n, pl.ds(k0, _KC), :].astype(jnp.float32)     # (KC, TQ)
            w = w_ref[0, :, pl.ds(k0, _KC), :].astype(jnp.float32)     # (3, KC, TQ)
            # Reduce the chunk over sublanes immediately -> acc stays (3, TQ).
            return acc + jnp.sum(w * c[None, :, :], axis=1)

        acc = lax.fori_loop(0, n_chunks, body,
                            jnp.zeros((3, tq), jnp.float32),
                            unroll=max(1, min(4, n_chunks)))
        o_ref[n, 0, :, :] = acc


def _im2col(x):
    """torch.nn.functional.unfold(x, 3, padding=1) -> (N, C*9, H*W)."""
    N, C, H, W = x.shape
    xp = jnp.pad(x, ((0, 0), (0, 0), (1, 1), (1, 1)))
    patches = [xp[:, :, kh:kh + H, kw:kw + W] for kh in range(3) for kw in range(3)]
    cols = jnp.stack(patches, axis=2)                        # (N, C, 9, H, W)
    return cols.reshape(N, C * 9, H * W)


def _vmem_budget():
    """(per-tile block budget, vmem_limit_bytes) per TPU generation."""
    try:
        kind = jax.devices()[0].device_kind.lower()
    except Exception:  # pragma: no cover - e.g. abstract/mock backends
        kind = ""
    if "v7" in kind:
        return 20 << 20, 40 << 20   # 64 MiB/TC part: conservative headroom
    return 40 << 20, 96 << 20       # v5e / v6e: 128 MiB physical VMEM


def _pick_tile_q(Qp, Kp, N, budget):
    """Largest lane-dense spatial tile dividing Qp whose blocks fit `budget`."""
    def need(t):  # double-buffered bf16 cols + bf16 weights + f32 out blocks
        return 2 * (2 * N * Kp * t + 2 * 3 * Kp * t + 4 * N * 3 * t)

    cap = min(Qp, 4096)
    t = (cap // 128) * 128
    while t > 128:
        if Qp % t == 0 and need(t) <= budget:
            return t
        t -= 128
    return 128


@functools.partial(jax.jit, static_argnames=("scale", "tile_q"))
def meta_upscale(x, lw, *, scale, tile_q=None):
    """Pallas implementation of MetaUpscale.forward(x, scale, lw).

    x:  (N, C, H, W) float32
    lw: reshapable to (H, s, W, s, C*9, 3) with s = ceil(scale)
        (the usual Meta-SR ((H*s)*(W*s), C*9*3) meta-weight tensor).
    returns (N, 3, s*H, s*W) float32
    """
    N, C, H, W = x.shape
    s = math.ceil(scale)
    P = s * s
    K = C * 9
    Q = H * W
    Kp = ((K + _KC - 1) // _KC) * _KC        # pad K to a bf16 sublane-group multiple
    Qp = ((Q + 127) // 128) * 128            # pad Q so stores are always lane-dense

    # ---- im2col (all s^2 replicas of repeat_x are identical copies of x, so one
    # copy suffices).  Streamed to the kernel as bf16; accumulate stays f32.
    # TODO(synk): fuse the 3x3 im2col into the kernel (load (C, tH+2, W) slabs and
    # form the 9 taps with shifted slices) to cut the cols HBM traffic ~9x.
    cols = _im2col(x).astype(jnp.bfloat16)                       # (N, K, Q)
    cols = jnp.pad(cols, ((0, 0), (0, Kp - K), (0, Qp - Q)))     # (N, Kp, Qp)

    # ---- weight layout: (H, s, W, s, K, 3) -> (P, 3, Kp, Qp); bf16 downcast is
    # fused into the permute so the written+re-read intermediate is half size.
    # TODO(synk): emit lw directly in (P, 3, K, Q) bf16 layout from the
    # weight-prediction head to remove this extra HBM round trip entirely.
    lw6 = jnp.reshape(lw, (H, s, W, s, K, 3)).astype(jnp.bfloat16)
    w_t = jnp.transpose(lw6, (1, 3, 5, 4, 0, 2)).reshape(P, 3, K, Q)
    w_t = jnp.pad(w_t, ((0, 0), (0, 0), (0, Kp - K), (0, Qp - Q)))  # (P,3,Kp,Qp)

    block_budget, vmem_cap = _vmem_budget()
    tq = tile_q if tile_q is not None else _pick_tile_q(Qp, Kp, N, block_budget)
    grid = (Qp // tq, P)

    # Double-buffered cols + weight + output blocks, with headroom.
    cols_blk = 2 * N * Kp * tq
    w_blk = 2 * 3 * Kp * tq
    out_blk = 4 * N * 3 * tq
    vmem_need = 2 * (cols_blk + w_blk + out_blk)
    vmem_limit = int(min(max(2 * vmem_need + (8 << 20), 32 << 20), vmem_cap))

    # Real kernel traffic: weights read once, cols read once per q-tile (resident
    # across p), f32 output written once.
    cost = pl.CostEstimate(
        flops=2 * N * P * 3 * K * Q,
        transcendentals=0,
        bytes_accessed=2 * (P * 3 * Kp * Qp + N * Kp * Qp) + 4 * N * P * 3 * Qp,
    )

    # out[n, p, c, q] = sum_k cols[n, k, q] * w_t[p, c, k, q]
    out = pl.pallas_call(
        _meta_upscale_kernel,
        out_shape=jax.ShapeDtypeStruct((N, P, 3, Qp), jnp.float32),
        grid_spec=pltpu.PrefetchScalarGridSpec(
            num_scalar_prefetch=0,
            grid=grid,
            in_specs=[
                # cols: independent of p (innermost axis) -> resident across p,
                # DMA'd once per q-tile, and only once total across the batch.
                pl.BlockSpec((N, Kp, tq), lambda qt, p: (0, 0, qt)),
                # weights: the dominant HBM stream, fetched exactly once.
                pl.BlockSpec((1, 3, Kp, tq), lambda qt, p: (p, 0, 0, qt)),
            ],
            out_specs=pl.BlockSpec((N, 1, 3, tq), lambda qt, p: (0, p, 0, qt)),
        ),
        compiler_params=pltpu.CompilerParams(
            dimension_semantics=("parallel", "parallel"),
            vmem_limit_bytes=vmem_limit,
        ),
        cost_estimate=cost,
    )(cols, w_t)                                                 # (N, P, 3, Qp)

    # ---- drop spatial padding + final pixel shuffle (mirrors the PyTorch views).
    out = out[..., :Q]
    out = out.reshape(N, s, s, 3, H, W)
    out = jnp.transpose(out, (0, 3, 4, 1, 5, 2))                 # (N, 3, H, s, W, s)
    return out.reshape(N, 3, s * H, s * W)


if __name__ == "__main__":
    key = jax.random.PRNGKey(0)
    k1, k2 = jax.random.split(key)

    N, C, H, W = 2, 4, 16, 16
    scale = 2.0
    s = math.ceil(scale)

    x = jax.random.normal(k1, (N, C, H, W), dtype=jnp.float32)
    # Meta-SR style local weights: one (C*9 -> 3) linear map per upscaled pixel.
    lw = jax.random.normal(k2, ((H * s) * (W * s), C * 9 * 3), dtype=jnp.float32) * 0.1

    out = meta_upscale(x, lw, scale=scale)
    out = jax.block_until_ready(out)

    # Pure-JAX reference of the same contraction + pixel shuffle, using the same
    # bf16 input cast with f32 accumulation (sanity check).
    cols = _im2col(x).astype(jnp.bfloat16).astype(jnp.float32)          # (N, K, Q)
    lw_r = jnp.reshape(lw.astype(jnp.bfloat16).astype(jnp.float32),
                       (H, s, W, s, C * 9, 3))
    lw_r = jnp.transpose(lw_r, (1, 3, 0, 2, 4, 5)).reshape(s * s, H * W, C * 9, 3)
    ref = jnp.einsum("nkq,pqkc->npcq", cols, lw_r,
                     precision=jax.lax.Precision.HIGHEST)
    ref = ref.reshape(N, s, s, 3, H, W)
    ref = jnp.transpose(ref, (0, 3, 4, 1, 5, 2)).reshape(N, 3, s * H, s * W)

    assert out.shape == (N, 3, s * H, s * W)
    assert jnp.allclose(out, ref, atol=1e-3, rtol=1e-3)
    print("KERNEL_OK")
</pallas_src>

<mosaic_0001>
module attributes {stable_mosaic.version = 11 : i64} {
  func.func @_meta_upscale_kernel(%arg0: i32, %arg1: i32, %arg2: memref<2x48x256xbf16, #tpu.memory_space<vmem>>, %arg3: memref<1x3x48x256xbf16, #tpu.memory_space<vmem>>, %arg4: memref<2x1x3x256xf32, #tpu.memory_space<vmem>>) attributes {dimension_semantics = [#tpu.dimension_semantics<parallel>, #tpu.dimension_semantics<parallel>], iteration_bounds = array<i64: 1, 4>, scalar_prefetch = 0 : i64, scratch_operands = 0 : i64, tpu.core_type = #tpu.core_type<tc>, window_params = [{transform_indices = @transform_0, window_bounds = array<i64: 2, 48, 256>}, {transform_indices = @transform_1, window_bounds = array<i64: 1, 3, 48, 256>}, {transform_indices = @transform_2, window_bounds = array<i64: 2, 1, 3, 256>}]} {
    %cst = arith.constant 0.000000e+00 : f32
    %0 = vector.broadcast %cst : f32 to vector<3x256xf32>
    %c0_i32 = arith.constant 0 : i32
    %c16_i32 = arith.constant 16 : i32
    %1 = arith.muli %c0_i32, %c16_i32 : i32
    %2 = tpu.assume_multiple %1, 16 : i32
    %c0 = arith.constant 0 : index
    %3 = arith.index_cast %2 : i32 to index
    %c0_0 = arith.constant 0 : index
    %4 = vector.load %arg2[%c0, %3, %c0_0] : memref<2x48x256xbf16, #tpu.memory_space<vmem>>, vector<1x16x256xbf16>
    %5 = vector.shape_cast %4 : vector<1x16x256xbf16> to vector<16x256xbf16>
    %6 = arith.extf %5 : vector<16x256xbf16> to vector<16x256xf32>
    %c0_1 = arith.constant 0 : index
    %c0_2 = arith.constant 0 : index
    %7 = arith.index_cast %2 : i32 to index
    %c0_3 = arith.constant 0 : index
    %8 = vector.load %arg3[%c0_1, %c0_2, %7, %c0_3] : memref<1x3x48x256xbf16, #tpu.memory_space<vmem>>, vector<1x3x16x256xbf16>
    %9 = vector.shape_cast %8 : vector<1x3x16x256xbf16> to vector<3x16x256xbf16>
    %10 = arith.extf %9 : vector<3x16x256xbf16> to vector<3x16x256xf32>
    %11 = vector.shape_cast %6 : vector<16x256xf32> to vector<1x16x256xf32>
    %12 = vector.broadcast %11 : vector<1x16x256xf32> to vector<3x16x256xf32>
    %13 = arith.mulf %10, %12 : vector<3x16x256xf32>
    %cst_4 = arith.constant dense<0.000000e+00> : vector<3x256xf32>
    %14 = vector.multi_reduction <add>, %13, %cst_4 [1] : vector<3x16x256xf32> to vector<3x256xf32>
    %15 = arith.addf %0, %14 : vector<3x256xf32>
    %c1_i32 = arith.constant 1 : i32
    %c16_i32_5 = arith.constant 16 : i32
    %16 = arith.muli %c1_i32, %c16_i32_5 : i32
    %17 = tpu.assume_multiple %16, 16 : i32
    %c0_6 = arith.constant 0 : index
    %18 = arith.index_cast %17 : i32 to index
    %c0_7 = arith.constant 0 : index
    %19 = vector.load %arg2[%c0_6, %18, %c0_7] : memref<2x48x256xbf16, #tpu.memory_space<vmem>>, vector<1x16x256xbf16>
    %20 = vector.shape_cast %19 : vector<1x16x256xbf16> to vector<16x256xbf16>
    %21 = arith.extf %20 : vector<16x256xbf16> to vector<16x256xf32>
    %c0_8 = arith.constant 0 : index
    %c0_9 = arith.constant 0 : index
    %22 = arith.index_cast %17 : i32 to index
    %c0_10 = arith.constant 0 : index
    %23 = vector.load %arg3[%c0_8, %c0_9, %22, %c0_10] : memref<1x3x48x256xbf16, #tpu.memory_space<vmem>>, vector<1x3x16x256xbf16>
    %24 = vector.shape_cast %23 : vector<1x3x16x256xbf16> to vector<3x16x256xbf16>
    %25 = arith.extf %24 : vector<3x16x256xbf16> to vector<3x16x256xf32>
    %26 = vector.shape_cast %21 : vector<16x256xf32> to vector<1x16x256xf32>
    %27 = vector.broadcast %26 : vector<1x16x256xf32> to vector<3x16x256xf32>
    %28 = arith.mulf %25, %27 : vector<3x16x256xf32>
    %cst_11 = arith.constant dense<0.000000e+00> : vector<3x256xf32>
    %29 = vector.multi_reduction <add>, %28, %cst_11 [1] : vector<3x16x256xf32> to vector<3x256xf32>
    %30 = arith.addf %15, %29 : vector<3x256xf32>
    %c2_i32 = arith.constant 2 : i32
    %c16_i32_12 = arith.constant 16 : i32
    %31 = arith.muli %c2_i32, %c16_i32_12 : i32
    %32 = tpu.assume_multiple %31, 16 : i32
    %c0_13 = arith.constant 0 : index
    %33 = arith.index_cast %32 : i32 to index
    %c0_14 = arith.constant 0 : index
    %34 = vector.load %arg2[%c0_13, %33, %c0_14] : memref<2x48x256xbf16, #tpu.memory_space<vmem>>, vector<1x16x256xbf16>
    %35 = vector.shape_cast %34 : vector<1x16x256xbf16> to vector<16x256xbf16>
    %36 = arith.extf %35 : vector<16x256xbf16> to vector<16x256xf32>
    %c0_15 = arith.constant 0 : index
    %c0_16 = arith.constant 0 : index
    %37 = arith.index_cast %32 : i32 to index
    %c0_17 = arith.constant 0 : index
    %38 = vector.load %arg3[%c0_15, %c0_16, %37, %c0_17] : memref<1x3x48x256xbf16, #tpu.memory_space<vmem>>, vector<1x3x16x256xbf16>
    %39 = vector.shape_cast %38 : vector<1x3x16x256xbf16> to vector<3x16x256xbf16>
    %40 = arith.extf %39 : vector<3x16x256xbf16> to vector<3x16x256xf32>
    %41 = vector.shape_cast %36 : vector<16x256xf32> to vector<1x16x256xf32>
    %42 = vector.broadcast %41 : vector<1x16x256xf32> to vector<3x16x256xf32>
    %43 = arith.mulf %40, %42 : vector<3x16x256xf32>
    %cst_18 = arith.constant dense<0.000000e+00> : vector<3x256xf32>
    %44 = vector.multi_reduction <add>, %43, %cst_18 [1] : vector<3x16x256xf32> to vector<3x256xf32>
    %45 = arith.addf %30, %44 : vector<3x256xf32>
    %c3_i32 = arith.constant 3 : i32
    %c0_19 = arith.constant 0 : index
    %c0_20 = arith.constant 0 : index
    %c0_21 = arith.constant 0 : index
    %c0_22 = arith.constant 0 : index
    %46 = vector.load %arg4[%c0_19, %c0_20, %c0_21, %c0_22] : memref<2x1x3x256xf32, #tpu.memory_space<vmem>>, vector<1x1x3x256xf32>
    %47 = vector.shape_cast %46 : vector<1x1x3x256xf32> to vector<3x256xf32>
    %48 = vector.shape_cast %45 : vector<3x256xf32> to vector<1x1x3x256xf32>
    tpu.vector_store %arg4[%c0_19, %c0_20, %c0_21, %c0_22], %48 {strides = array<i32>} : memref<2x1x3x256xf32, #tpu.memory_space<vmem>>, vector<1x1x3x256xf32>,
    %cst_23 = arith.constant 0.000000e+00 : f32
    %49 = vector.broadcast %cst_23 : f32 to vector<3x256xf32>
    %c0_i32_24 = arith.constant 0 : i32
    %c16_i32_25 = arith.constant 16 : i32
    %50 = arith.muli %c0_i32_24, %c16_i32_25 : i32
    %51 = tpu.assume_multiple %50, 16 : i32
    %c1 = arith.constant 1 : index
    %52 = arith.index_cast %51 : i32 to index
    %c0_26 = arith.constant 0 : index
    %53 = vector.load %arg2[%c1, %52, %c0_26] : memref<2x48x256xbf16, #tpu.memory_space<vmem>>, vector<1x16x256xbf16>
    %54 = vector.shape_cast %53 : vector<1x16x256xbf16> to vector<16x256xbf16>
    %55 = arith.extf %54 : vector<16x256xbf16> to vector<16x256xf32>
    %c0_27 = arith.constant 0 : index
    %c0_28 = arith.constant 0 : index
    %56 = arith.index_cast %51 : i32 to index
    %c0_29 = arith.constant 0 : index
    %57 = vector.load %arg3[%c0_27, %c0_28, %56, %c0_29] : memref<1x3x48x256xbf16, #tpu.memory_space<vmem>>, vector<1x3x16x256xbf16>
    %58 = vector.shape_cast %57 : vector<1x3x16x256xbf16> to vector<3x16x256xbf16>
    %59 = arith.extf %58 : vector<3x16x256xbf16> to vector<3x16x256xf32>
    %60 = vector.shape_cast %55 : vector<16x256xf32> to vector<1x16x256xf32>
    %61 = vector.broadcast %60 : vector<1x16x256xf32> to vector<3x16x256xf32>
    %62 = arith.mulf %59, %61 : vector<3x16x256xf32>
    %cst_30 = arith.constant dense<0.000000e+00> : vector<3x256xf32>
    %63 = vector.multi_reduction <add>, %62, %cst_30 [1] : vector<3x16x256xf32> to vector<3x256xf32>
    %64 = arith.addf %49, %63 : vector<3x256xf32>
    %c1_i32_31 = arith.constant 1 : i32
    %c16_i32_32 = arith.constant 16 : i32
    %65 = arith.muli %c1_i32_31, %c16_i32_32 : i32
    %66 = tpu.assume_multiple %65, 16 : i32
    %c1_33 = arith.constant 1 : index
    %67 = arith.index_cast %66 : i32 to index
    %c0_34 = arith.constant 0 : index
    %68 = vector.load %arg2[%c1_33, %67, %c0_34] : memref<2x48x256xbf16, #tpu.memory_space<vmem>>, vector<1x16x256xbf16>
    %69 = vector.shape_cast %68 : vector<1x16x256xbf16> to vector<16x256xbf16>
    %70 = arith.extf %69 : vector<16x256xbf16> to vector<16x256xf32>
    %c0_35 = arith.constant 0 : index
    %c0_36 = arith.constant 0 : index
    %71 = arith.index_cast %66 : i32 to index
    %c0_37 = arith.constant 0 : index
    %72 = vector.load %arg3[%c0_35, %c0_36, %71, %c0_37] : memref<1x3x48x256xbf16, #tpu.memory_space<vmem>>, vector<1x3x16x256xbf16>
    %73 = vector.shape_cast %72 : vector<1x3x16x256xbf16> to vector<3x16x256xbf16>
    %74 = arith.extf %73 : vector<3x16x256xbf16> to vector<3x16x256xf32>
    %75 = vector.shape_cast %70 : vector<16x256xf32> to vector<1x16x256xf32>
    %76 = vector.broadcast %75 : vector<1x16x256xf32> to vector<3x16x256xf32>
    %77 = arith.mulf %74, %76 : vector<3x16x256xf32>
    %cst_38 = arith.constant dense<0.000000e+00> : vector<3x256xf32>
    %78 = vector.multi_reduction <add>, %77, %cst_38 [1] : vector<3x16x256xf32> to vector<3x256xf32>
    %79 = arith.addf %64, %78 : vector<3x256xf32>
    %c2_i32_39 = arith.constant 2 : i32
    %c16_i32_40 = arith.constant 16 : i32
    %80 = arith.muli %c2_i32_39, %c16_i32_40 : i32
    %81 = tpu.assume_multiple %80, 16 : i32
    %c1_41 = arith.constant 1 : index
    %82 = arith.index_cast %81 : i32 to index
    %c0_42 = arith.constant 0 : index
    %83 = vector.load %arg2[%c1_41, %82, %c0_42] : memref<2x48x256xbf16, #tpu.memory_space<vmem>>, vector<1x16x256xbf16>
    %84 = vector.shape_cast %83 : vector<1x16x256xbf16> to vector<16x256xbf16>
    %85 = arith.extf %84 : vector<16x256xbf16> to vector<16x256xf32>
    %c0_43 = arith.constant 0 : index
    %c0_44 = arith.constant 0 : index
    %86 = arith.index_cast %81 : i32 to index
    %c0_45 = arith.constant 0 : index
    %87 = vector.load %arg3[%c0_43, %c0_44, %86, %c0_45] : memref<1x3x48x256xbf16, #tpu.memory_space<vmem>>, vector<1x3x16x256xbf16>
    %88 = vector.shape_cast %87 : vector<1x3x16x256xbf16> to vector<3x16x256xbf16>
    %89 = arith.extf %88 : vector<3x16x256xbf16> to vector<3x16x256xf32>
    %90 = vector.shape_cast %85 : vector<16x256xf32> to vector<1x16x256xf32>
    %91 = vector.broadcast %90 : vector<1x16x256xf32> to vector<3x16x256xf32>
    %92 = arith.mulf %89, %91 : vector<3x16x256xf32>
    %cst_46 = arith.constant dense<0.000000e+00> : vector<3x256xf32>
    %93 = vector.multi_reduction <add>, %92, %cst_46 [1] : vector<3x16x256xf32> to vector<3x256xf32>
    %94 = arith.addf %79, %93 : vector<3x256xf32>
    %c3_i32_47 = arith.constant 3 : i32
    %c1_48 = arith.constant 1 : index
    %c0_49 = arith.constant 0 : index
    %c0_50 = arith.constant 0 : index
    %c0_51 = arith.constant 0 : index
    %95 = vector.load %arg4[%c1_48, %c0_49, %c0_50, %c0_51] : memref<2x1x3x256xf32, #tpu.memory_space<vmem>>, vector<1x1x3x256xf32>
    %96 = vector.shape_cast %95 : vector<1x1x3x256xf32> to vector<3x256xf32>
    %97 = vector.shape_cast %94 : vector<3x256xf32> to vector<1x1x3x256xf32>
    tpu.vector_store %arg4[%c1_48, %c0_49, %c0_50, %c0_51], %97 {strides = array<i32>} : memref<2x1x3x256xf32, #tpu.memory_space<vmem>>, vector<1x1x3x256xf32>,
    return
  }
  func.func @transform_0(%arg0: i32, %arg1: i32) -> (i32, i32, i32) {
    %c0_i32 = arith.constant 0 : i32
    %c0_i32_0 = arith.constant 0 : i32
    %c0_i32_1 = arith.constant 0 : i32
    return %c0_i32, %c0_i32_0, %arg0 : i32, i32, i32
  }
  func.func @transform_1(%arg0: i32, %arg1: i32) -> (i32, i32, i32, i32) {
    %c0_i32 = arith.constant 0 : i32
    %c0_i32_0 = arith.constant 0 : i32
    %c0_i32_1 = arith.constant 0 : i32
    return %arg1, %c0_i32, %c0_i32_0, %arg0 : i32, i32, i32, i32
  }
  func.func @transform_2(%arg0: i32, %arg1: i32) -> (i32, i32, i32, i32) {
    %c0_i32 = arith.constant 0 : i32
    %c0_i32_0 = arith.constant 0 : i32
    %c0_i32_1 = arith.constant 0 : i32
    return %c0_i32, %arg1, %c0_i32_0, %arg0 : i32, i32, i32, i32
  }
}

</mosaic_0001>

<llo_original>
// kernel: meta_upscale.1
$region0: #{meta_upscale.1}
  #allocation0 [shape = 'u32[]', space=smem, size = 0x4, offset = 0x4, fixed_abs, tag = 'smem constant byte address 0x4 - core index']
  #allocation1 [shape = 'u32[72,128]{1,0:T(1,128)}', space=vmem, size = 0x9000, scoped, tag = 'internal scratch']
  %s0 = inlined_call_operand.vmem [shape: bf16[2,48,256], index: 0, kind: input, shape index: {}]
  %s1 = inlined_call_operand.vmem [shape: bf16[4,3,48,256], index: 1, kind: input, shape index: {}]
  %s2 = inlined_call_operand.vmem [shape: f32[2,4,3,256], index: 2, kind: output, shape index: {}]
  %s3 = sld [smem:[#allocation0]]
  $region75: #{meta_upscale.1} parent=0
    _
  %s5 = ssub.s32 1, %s3
  %s6 = scalar_select 0, %s5, %s3
  $region1: #{meta_upscale.1} parent=0
    #allocation2 [shape = 'u8[16384]{0}', space=vmem, size = 0x4000, scoped, tag = 'output window, operand 0']
    loop: start=0, step=1, limit=6
    $region2: #{meta_upscale.1} parent=1 // loop_pre_header
      _
    $region3: #{meta_upscale.1} parent=1 // loop_header
      %s8 = sphi 0, %s12
      %p9 = scmp.ge.s32.totalorder %s8, 6
      %s15 = sphi 0, %s27
      %s16 = sphi 0, %s23
      %s17 = sphi 0, %s15
      %s18 = sphi 0, %s16
      %s19 = sphi 0, %s17
      %s20 = sphi 0, %s18
      %s30 = sphi 0, %s32
      %s33 = sphi 0, %s30
      %s34 = sphi 0, %s33
      %s50 = sphi 0, %s34
      %s58 = sphi 0, %s60
      %s61 = sphi 0, %s58
      %s62 = sphi 0, %s61
      %s78 = sphi 0, %s62
      %s86 = sphi 0, %s88
      %s89 = sphi 0, %s86
      %s90 = sphi 0, %s89
      %s106 = sphi 0, %s90
    $region4: #{meta_upscale.1} parent=1 // loop_header_branch
      %11 = sbr.rel (%p9) target = $region8
    $region5: #{meta_upscale.1} parent=1 // loop_body
      %s13 = ssub.s32 %s8, 1
      %s14 = ssub.s32 %s8, 2
      %s21 = sadd.s32 1, %s16
      %p22 = scmp.ge.s32.totalorder %s21, 4
      %s23 = scalar_select %p22, 0, %s21
      %s24 = sadd.s32 1, %s15
      %s25 = scalar_select %p22, %s24, %s15
      %p26 = scmp.ge.s32.totalorder %s25, 1
      %s27 = scalar_select %p26, 0, %s25
      %s28 = ssub.s32 %s15, %s27
      %p29 = scmp.eq.s32.totalorder %s28, 0
      %s31 = sadd.s32 %s30, 1
      %s32 = scalar_select %p29, %s30, %s31
      %p35 = pneg %p29
      %p36 = scmp.eq.s32.totalorder %s8, 3
      %p37 = por %p35, %p36
      %p38 = scmp.ne.s32.totalorder %s30, %s33
      %p39 = scmp.eq.s32.totalorder %s8, 0
      %p40 = por %p38, %p39
      %p41 = scmp.ne.s32.totalorder %s30, %s33
      %p42 = scmp.eq.s32.totalorder %s13, 3
      %p43 = por %p41, %p42
      %p44 = scmp.ne.s32.totalorder %s33, %s34
      %p45 = scmp.eq.s32.totalorder %s13, 0
      %p46 = por %p44, %p45
      %p47 = scmp.ne.s32.totalorder %s33, %s34
      %p48 = scmp.eq.s32.totalorder %s14, 3
      %p49 = por %p47, %p48
      %p51 = scmp.ne.s32.totalorder %s34, %s50
      %p52 = scmp.eq.s32.totalorder %s14, 0
      %p53 = por %p51, %p52
      %s54 = ssub.s32 %s16, %s23
      %s55 = ssub.s32 %s15, %s27
      %s56 = sor.u32 %s54, %s55
      %p57 = scmp.eq.s32.totalorder %s56, 0
      %s59 = sadd.s32 %s58, 1
      %s60 = scalar_select %p57, %s58, %s59
      %p63 = pneg %p57
      %p64 = scmp.eq.s32.totalorder %s8, 3
      %p65 = por %p63, %p64
      %p66 = scmp.ne.s32.totalorder %s58, %s61
      %p67 = scmp.eq.s32.totalorder %s8, 0
      %p68 = por %p66, %p67
      %p69 = scmp.ne.s32.totalorder %s58, %s61
      %p70 = scmp.eq.s32.totalorder %s13, 3
      %p71 = por %p69, %p70
      %p72 = scmp.ne.s32.totalorder %s61, %s62
      %p73 = scmp.eq.s32.totalorder %s13, 0
      %p74 = por %p72, %p73
      %p75 = scmp.ne.s32.totalorder %s61, %s62
      %p76 = scmp.eq.s32.totalorder %s14, 3
      %p77 = por %p75, %p76
      %p79 = scmp.ne.s32.totalorder %s62, %s78
      %p80 = scmp.eq.s32.totalorder %s14, 0
      %p81 = por %p79, %p80
      %s82 = ssub.s32 %s16, %s23
      %s83 = ssub.s32 %s15, %s27
      %s84 = sor.u32 %s82, %s83
      %p85 = scmp.eq.s32.totalorder %s84, 0
      %s87 = sadd.s32 %s86, 1
      %s88 = scalar_select %p85, %s86, %s87
      %p91 = pneg %p85
      %p92 = scmp.eq.s32.totalorder %s8, 3
      %p93 = por %p91, %p92
      %p94 = scmp.ne.s32.totalorder %s86, %s89
      %p95 = scmp.eq.s32.totalorder %s8, 0
      %p96 = por %p94, %p95
      %p97 = scmp.ne.s32.totalorder %s86, %s89
      %p98 = scmp.eq.s32.totalorder %s13, 3
      %p99 = por %p97, %p98
      %p100 = scmp.ne.s32.totalorder %s89, %s90
      %p101 = scmp.eq.s32.totalorder %s13, 0
      %p102 = por %p100, %p101
      %p103 = scmp.ne.s32.totalorder %s89, %s90
      %p104 = scmp.eq.s32.totalorder %s14, 3
      %p105 = por %p103, %p104
      %p107 = scmp.ne.s32.totalorder %s90, %s106
      %p108 = scmp.eq.s32.totalorder %s14, 0
      %p109 = por %p107, %p108
      %p110 = scmp.le.s32.totalorder 1, %s8
      %p111 = scmp.lt.s32.totalorder %s8, 5
      %p112 = pnand %p110, %p111
      %p113 = pneg %p112
      // Predicated region
      $region9: #{meta_upscale.1} parent=5 // pred_check
        _
      $region10: #{meta_upscale.1} parent=5 // pred_check_branch
        %115 = sbr.rel (%p112) target = $region12
      $region11: #{meta_upscale.1} parent=5 // pred_region
        %s116 = ssub.s32 %s8, 1
        // Predicated region
        $region13: #{meta_upscale.1} parent=11 // pred_check
          %p117 = pneg %p46
        $region14: #{meta_upscale.1} parent=11 // pred_check_branch
          %119 = sbr.rel (%p117) target = $region16
        $region15: #{meta_upscale.1} parent=11 // pred_region
          %s120 = smul.u32 2, %s17
          %p121 = scmp.lt.s32.totalorder %s120, 1
          %s122 = scalar_select %p121, %s120, 1
          %s123 = smul.addr %s122, 4
          %s124 = scalar_lea.vmem %s0, %s123
          %s125 = smul.u32 2, %s17
        $region16: #{meta_upscale.1} parent=11 // pred_fallthru
          _
      $region12: #{meta_upscale.1} parent=5 // pred_fallthru
        _
      %p126 = scmp.lt.s32.totalorder %s8, 4
      // Predicated region
      $region17: #{meta_upscale.1} parent=5 // pred_check
        %p127 = pneg %p126
      $region18: #{meta_upscale.1} parent=5 // pred_check_branch
        %129 = sbr.rel (%p127) target = $region20
      $region19: #{meta_upscale.1} parent=5 // pred_region
        // Predicated region
        $region21: #{meta_upscale.1} parent=19 // pred_check
          %p130 = pneg %p68
        $region22: #{meta_upscale.1} parent=19 // pred_check_branch
          %132 = sbr.rel (%p130) target = $region24
        $region23: #{meta_upscale.1} parent=19 // pred_region
          %s133 = smul.u32 2, %s15
          %p134 = scmp.lt.s32.totalorder %s16, 3
          %s135 = scalar_select %p134, %s16, 3
          %p136 = scmp.lt.s32.totalorder %s133, 1
          %s137 = scalar_select %p136, %s133, 1
          %s138 = smul.addr %s135, 36
          %s139 = sadd.s32 %s137, %s138
          %s140 = smul.addr %s139, 4
          %s141 = scalar_lea.vmem %s1, %s140
          %s142 = smul.u32 2, %s15
        $region24: #{meta_upscale.1} parent=19 // pred_fallthru
          _
      $region20: #{meta_upscale.1} parent=5 // pred_fallthru
        _
      %p143 = scmp.le.s32.totalorder 1, %s8
      %p144 = scmp.lt.s32.totalorder %s8, 5
      %p145 = pnand %p143, %p144
      %p146 = pneg %p145
      // Predicated region
      $region25: #{meta_upscale.1} parent=5 // pred_check
        _
      $region26: #{meta_upscale.1} parent=5 // pred_check_branch
        %148 = sbr.rel (%p145) target = $region28
      $region27: #{meta_upscale.1} parent=5 // pred_region
        %s149 = ssub.s32 %s8, 1
        %s150 = smul.u32 2, %s17
        %p151 = scmp.lt.s32.totalorder %s150, 1
        %s152 = scalar_select %p151, %s150, 1
        %s153 = smul.addr %s152, 4
        %s154 = scalar_lea.vmem %s0, %s153
        %p155 = pneg %p46
        %p156 = pneg %p43
        %s157 = smul.u32 2, %s17
        %p158 = scmp.lt.s32.totalorder %s18, 3
        %s159 = scalar_select %p158, %s18, 3
        %p160 = scmp.lt.s32.totalorder %s157, 1
        %s161 = scalar_select %p160, %s157, 1
        %s162 = smul.addr %s159, 36
        %s163 = sadd.s32 %s161, %s162
        %s164 = smul.addr %s163, 4
        %s165 = scalar_lea.vmem %s1, %s164
        %p166 = pneg %p74
        %p167 = pneg %p71
        %p168 = pneg %p102
        %p169 = pneg %p99
        %s170 = sand.u32 %s89, 1
        %s171 = sand.u32 %s89, 1
        %s172 = smul.addr %s171, 16
        %s173 = scalar_lea.vmem [#allocation2], %s172
        %s174 = smul.u32 2, %s17
        %p175 = scmp.lt.s32.totalorder %s174, 1
        %s176 = scalar_select %p175, %s174, 1
        %s177 = smul.addr %s176, 4
        %s178 = scalar_lea.vmem %s0, %s177
        %s179 = smul.u32 2, %s17
        %s180 = smul.u32 2, %s17
        %p181 = scmp.lt.s32.totalorder %s18, 3
        %s182 = scalar_select %p181, %s18, 3
        %p183 = scmp.lt.s32.totalorder %s180, 1
        %s184 = scalar_select %p183, %s180, 1
        %s185 = smul.addr %s182, 36
        %s186 = sadd.s32 %s184, %s185
        %s187 = smul.addr %s186, 4
        %s188 = scalar_lea.vmem %s1, %s187
        %s189 = smul.u32 2, %s17
        %s190 = smul.u32 2, %s17
        %s191 = smul.u32 0, 2
        %s192 = smul.addr %s191, 4
        %s193 = scalar_lea.vmem %s178, %s192
        %v194 = vld [vmem:[%s193] sm:$0xff]
        %v195 = vld [vmem:[%s193 + $0x8] sm:$0xff]
        %v196 = vunpack.c.l.bf16 %v194
        %v197 = vunpack.c.h.bf16 %v194
        %v198 = vunpack.c.l.bf16 %v195
        %v199 = vunpack.c.h.bf16 %v195
        %s200 = smul.addr %s191, 4
        %s201 = scalar_lea.vmem %s188, %s200
        %v202 = vld [vmem:[%s201] sm:$0xff]
        %v203 = vld [vmem:[%s201 + $0x8] sm:$0xff]
        %v204 = vld [vmem:[%s201 + $0x30] sm:$0xff]
        %v205 = vld [vmem:[%s201 + $0x38] sm:$0xff]
        %v206 = vld [vmem:[%s201 + $0x60] sm:$0xff]
        %v207 = vld [vmem:[%s201 + $0x68] sm:$0xff]
        %v208 = vunpack.c.l.bf16 %v202
        %v209 = vunpack.c.h.bf16 %v202
        %v210 = vunpack.c.l.bf16 %v203
        %v211 = vunpack.c.h.bf16 %v203
        %v212 = vunpack.c.l.bf16 %v204
        %v213 = vunpack.c.h.bf16 %v204
        %v214 = vunpack.c.l.bf16 %v205
        %v215 = vunpack.c.h.bf16 %v205
        %v216 = vunpack.c.l.bf16 %v206
        %v217 = vunpack.c.h.bf16 %v206
        %v218 = vunpack.c.l.bf16 %v207
        %v219 = vunpack.c.h.bf16 %v207
        %v220 = vmul.f32 %v208, %v196
        %v221 = vmul.f32 %v209, %v197
        %v222 = vmul.f32 %v210, %v198
        %v223 = vmul.f32 %v211, %v199
        %v224 = vmul.f32 %v212, %v196
        %v225 = vmul.f32 %v213, %v197
        %v226 = vmul.f32 %v214, %v198
        %v227 = vmul.f32 %v215, %v199
        %v228 = vmul.f32 %v216, %v196
        %v229 = vmul.f32 %v217, %v197
        %v230 = vmul.f32 %v218, %v198
        %v231 = vmul.f32 %v219, %v199
        %v232 = vadd.f32 %v220, %v222
        %v233 = vrot.slane %v232, 4
        %v234 = vadd.f32 %v232, %v233
        %v235 = vrot.slane %v234, 2
        %v236 = vadd.f32 %v234, %v235
        %v237 = vrot.slane %v236, 1
        %v238 = vadd.f32 %v236, %v237
        %v239 = vadd.f32 %v221, %v223
        %v240 = vrot.slane %v239, 4
        %v241 = vadd.f32 %v239, %v240
        %v242 = vrot.slane %v241, 2
        %v243 = vadd.f32 %v241, %v242
        %v244 = vrot.slane %v243, 1
        %v245 = vadd.f32 %v243, %v244
        %v246 = vadd.f32 %v224, %v226
        %v247 = vrot.slane %v246, 4
        %v248 = vadd.f32 %v246, %v247
        %v249 = vrot.slane %v248, 2
        %v250 = vadd.f32 %v248, %v249
        %v251 = vrot.slane %v250, 1
        %v252 = vadd.f32 %v250, %v251
        %v253 = vadd.f32 %v225, %v227
        %v254 = vrot.slane %v253, 4
        %v255 = vadd.f32 %v253, %v254
        %v256 = vrot.slane %v255, 2
        %v257 = vadd.f32 %v255, %v256
        %v258 = vrot.slane %v257, 1
        %v259 = vadd.f32 %v257, %v258
        %v260 = vadd.f32 %v228, %v230
        %v261 = vrot.slane %v260, 4
        %v262 = vadd.f32 %v260, %v261
        %v263 = vrot.slane %v262, 2
        %v264 = vadd.f32 %v262, %v263
        %v265 = vrot.slane %v264, 1
        %v266 = vadd.f32 %v264, %v265
        %v267 = vadd.f32 %v229, %v231
        %v268 = vrot.slane %v267, 4
        %v269 = vadd.f32 %v267, %v268
        %v270 = vrot.slane %v269, 2
        %v271 = vadd.f32 %v269, %v270
        %v272 = vrot.slane %v271, 1
        %v273 = vadd.f32 %v271, %v272
        %v274 = vadd.f32 %v238, 0.0
        %v275 = vadd.f32 %v245, 0.0
        %v276 = vadd.f32 %v252, 0.0
        %v277 = vadd.f32 %v259, 0.0
        %v278 = vadd.f32 %v266, 0.0
        %v279 = vadd.f32 %v273, 0.0
        %s280 = smul.u32 2, 2
        %s281 = smul.addr %s280, 4
        %s282 = scalar_lea.vmem %s178, %s281
        %v283 = vld [vmem:[%s282] sm:$0xff]
        %v284 = vld [vmem:[%s282 + $0x8] sm:$0xff]
        %v285 = vunpack.c.l.bf16 %v283
        %v286 = vunpack.c.h.bf16 %v283
        %v287 = vunpack.c.l.bf16 %v284
        %v288 = vunpack.c.h.bf16 %v284
        %s289 = smul.addr %s280, 4
        %s290 = scalar_lea.vmem %s188, %s289
        %v291 = vld [vmem:[%s290] sm:$0xff]
        %v292 = vld [vmem:[%s290 + $0x8] sm:$0xff]
        %v293 = vld [vmem:[%s290 + $0x30] sm:$0xff]
        %v294 = vld [vmem:[%s290 + $0x38] sm:$0xff]
        %v295 = vld [vmem:[%s290 + $0x60] sm:$0xff]
        %v296 = vld [vmem:[%s290 + $0x68] sm:$0xff]
        %v297 = vunpack.c.l.bf16 %v291
        %v298 = vunpack.c.h.bf16 %v291
        %v299 = vunpack.c.l.bf16 %v292
        %v300 = vunpack.c.h.bf16 %v292
        %v301 = vunpack.c.l.bf16 %v293
        %v302 = vunpack.c.h.bf16 %v293
        %v303 = vunpack.c.l.bf16 %v294
        %v304 = vunpack.c.h.bf16 %v294
        %v305 = vunpack.c.l.bf16 %v295
        %v306 = vunpack.c.h.bf16 %v295
        %v307 = vunpack.c.l.bf16 %v296
        %v308 = vunpack.c.h.bf16 %v296
        %v309 = vmul.f32 %v297, %v285
        %v310 = vmul.f32 %v298, %v286
        %v311 = vmul.f32 %v299, %v287
        %v312 = vmul.f32 %v300, %v288
        %v313 = vmul.f32 %v301, %v285
        %v314 = vmul.f32 %v302, %v286
        %v315 = vmul.f32 %v303, %v287
        %v316 = vmul.f32 %v304, %v288
        %v317 = vmul.f32 %v305, %v285
        %v318 = vmul.f32 %v306, %v286
        %v319 = vmul.f32 %v307, %v287
        %v320 = vmul.f32 %v308, %v288
        %v321 = vadd.f32 %v309, %v311
        %v322 = vrot.slane %v321, 4
        %v323 = vadd.f32 %v321, %v322
        %v324 = vrot.slane %v323, 2
        %v325 = vadd.f32 %v323, %v324
        %v326 = vrot.slane %v325, 1
        %v327 = vadd.f32 %v325, %v326
        %v328 = vadd.f32 %v310, %v312
        %v329 = vrot.slane %v328, 4
        %v330 = vadd.f32 %v328, %v329
        %v331 = vrot.slane %v330, 2
        %v332 = vadd.f32 %v330, %v331
        %v333 = vrot.slane %v332, 1
        %v334 = vadd.f32 %v332, %v333
        %v335 = vadd.f32 %v313, %v315
        %v336 = vrot.slane %v335, 4
        %v337 = vadd.f32 %v335, %v336
        %v338 = vrot.slane %v337, 2
        %v339 = vadd.f32 %v337, %v338
        %v340 = vrot.slane %v339, 1
        %v341 = vadd.f32 %v339, %v340
        %v342 = vadd.f32 %v314, %v316
        %v343 = vrot.slane %v342, 4
        %v344 = vadd.f32 %v342, %v343
        %v345 = vrot.slane %v344, 2
        %v346 = vadd.f32 %v344, %v345
        %v347 = vrot.slane %v346, 1
        %v348 = vadd.f32 %v346, %v347
        %v349 = vadd.f32 %v317, %v319
        %v350 = vrot.slane %v349, 4
        %v351 = vadd.f32 %v349, %v350
        %v352 = vrot.slane %v351, 2
        %v353 = vadd.f32 %v351, %v352
        %v354 = vrot.slane %v353, 1
        %v355 = vadd.f32 %v353, %v354
        %v356 = vadd.f32 %v318, %v320
        %v357 = vrot.slane %v356, 4
        %v358 = vadd.f32 %v356, %v357
        %v359 = vrot.slane %v358, 2
        %v360 = vadd.f32 %v358, %v359
        %v361 = vrot.slane %v360, 1
        %v362 = vadd.f32 %v360, %v361
        %v363 = vadd.f32 %v274, %v327
        %v364 = vadd.f32 %v275, %v334
        %v365 = vadd.f32 %v276, %v341
        %v366 = vadd.f32 %v277, %v348
        %v367 = vadd.f32 %v278, %v355
        %v368 = vadd.f32 %v279, %v362
        %s369 = smul.u32 4, 2
        %s370 = smul.addr %s369, 4
        %s371 = scalar_lea.vmem %s178, %s370
        %v372 = vld [vmem:[%s371] sm:$0xff]
        %v373 = vld [vmem:[%s371 + $0x8] sm:$0xff]
        %v374 = vunpack.c.l.bf16 %v372
        %v375 = vunpack.c.h.bf16 %v372
        %v376 = vunpack.c.l.bf16 %v373
        %v377 = vunpack.c.h.bf16 %v373
        %s378 = smul.addr %s369, 4
        %s379 = scalar_lea.vmem %s188, %s378
        %v380 = vld [vmem:[%s379] sm:$0xff]
        %v381 = vld [vmem:[%s379 + $0x8] sm:$0xff]
        %v382 = vld [vmem:[%s379 + $0x30] sm:$0xff]
        %v383 = vld [vmem:[%s379 + $0x38] sm:$0xff]
        %v384 = vld [vmem:[%s379 + $0x60] sm:$0xff]
        %v385 = vld [vmem:[%s379 + $0x68] sm:$0xff]
        %v386 = vunpack.c.l.bf16 %v380
        %v387 = vunpack.c.h.bf16 %v380
        %v388 = vunpack.c.l.bf16 %v381
        %v389 = vunpack.c.h.bf16 %v381
        %v390 = vunpack.c.l.bf16 %v382
        %v391 = vunpack.c.h.bf16 %v382
        %v392 = vunpack.c.l.bf16 %v383
        %v393 = vunpack.c.h.bf16 %v383
        %v394 = vunpack.c.l.bf16 %v384
        %v395 = vunpack.c.h.bf16 %v384
        %v396 = vunpack.c.l.bf16 %v385
        %v397 = vunpack.c.h.bf16 %v385
        %v398 = vmul.f32 %v386, %v374
        %v399 = vmul.f32 %v387, %v375
        %v400 = vmul.f32 %v388, %v376
        %v401 = vmul.f32 %v389, %v377
        %v402 = vmul.f32 %v390, %v374
        %v403 = vmul.f32 %v391, %v375
        %v404 = vmul.f32 %v392, %v376
        %v405 = vmul.f32 %v393, %v377
        %v406 = vmul.f32 %v394, %v374
        %v407 = vmul.f32 %v395, %v375
        %v408 = vmul.f32 %v396, %v376
        %v409 = vmul.f32 %v397, %v377
        %v410 = vadd.f32 %v398, %v400
        %v411 = vrot.slane %v410, 4
        %v412 = vadd.f32 %v410, %v411
        %v413 = vrot.slane %v412, 2
        %v414 = vadd.f32 %v412, %v413
        %v415 = vrot.slane %v414, 1
        %v416 = vadd.f32 %v414, %v415
        %v417 = vadd.f32 %v399, %v401
        %v418 = vrot.slane %v417, 4
        %v419 = vadd.f32 %v417, %v418
        %v420 = vrot.slane %v419, 2
        %v421 = vadd.f32 %v419, %v420
        %v422 = vrot.slane %v421, 1
        %v423 = vadd.f32 %v421, %v422
        %v424 = vadd.f32 %v402, %v404
        %v425 = vrot.slane %v424, 4
        %v426 = vadd.f32 %v424, %v425
        %v427 = vrot.slane %v426, 2
        %v428 = vadd.f32 %v426, %v427
        %v429 = vrot.slane %v428, 1
        %v430 = vadd.f32 %v428, %v429
        %v431 = vadd.f32 %v403, %v405
        %v432 = vrot.slane %v431, 4
        %v433 = vadd.f32 %v431, %v432
        %v434 = vrot.slane %v433, 2
        %v435 = vadd.f32 %v433, %v434
        %v436 = vrot.slane %v435, 1
        %v437 = vadd.f32 %v435, %v436
        %v438 = vadd.f32 %v406, %v408
        %v439 = vrot.slane %v438, 4
        %v440 = vadd.f32 %v438, %v439
        %v441 = vrot.slane %v440, 2
        %v442 = vadd.f32 %v440, %v441
        %v443 = vrot.slane %v442, 1
        %v444 = vadd.f32 %v442, %v443
        %v445 = vadd.f32 %v407, %v409
        %v446 = vrot.slane %v445, 4
        %v447 = vadd.f32 %v445, %v446
        %v448 = vrot.slane %v447, 2
        %v449 = vadd.f32 %v447, %v448
        %v450 = vrot.slane %v449, 1
        %v451 = vadd.f32 %v449, %v450
        %v452 = vadd.f32 %v363, %v416
        %v453 = vadd.f32 %v364, %v423
        %v454 = vadd.f32 %v365, %v430
        %v455 = vadd.f32 %v366, %v437
        %v456 = vadd.f32 %v367, %v444
        %v457 = vadd.f32 %v368, %v451
        %v464 = vrot.slane %v453, 4
        %v465 = vrot.slane %v455, 4
        %v466 = vrot.slane %v457, 4
        %vm467 = vcmask 1043456
        %v468 = vsel %vm467, %v452, %v464
        %v469 = vsel %vm467, %v454, %v465
        %v470 = vsel %vm467, %v456, %v466
        %v471 = vrot.slane %v469, 7
        %vm472 = vcmask 1041409
        %v473 = vsel %vm472, %v471, %v468
        %vm474 = vcmask 1045509
        %v475 = vsel %vm474, %v471, %v473
        %v476 = vrot.slane %v470, 6
        %vm477 = vcmask 1042434
        %v478 = vsel %vm477, %v476, %v475
        %vm479 = vcmask 1046534
        %v480 = vsel %vm479, %v476, %v478
        %482 = vst [vmem:[%s173] sm:$0x77] %v480
        %s483 = sadd.s32 %s191, 12
        %s484 = smul.addr %s483, 4
        %s485 = scalar_lea.vmem %s178, %s484
        %v486 = vld [vmem:[%s485] sm:$0xff]
        %v487 = vld [vmem:[%s485 + $0x8] sm:$0xff]
        %v488 = vunpack.c.l.bf16 %v486
        %v489 = vunpack.c.h.bf16 %v486
        %v490 = vunpack.c.l.bf16 %v487
        %v491 = vunpack.c.h.bf16 %v487
        %v492 = vld [vmem:[%s201] sm:$0xff]
        %v493 = vld [vmem:[%s201 + $0x8] sm:$0xff]
        %v494 = vld [vmem:[%s201 + $0x30] sm:$0xff]
        %v495 = vld [vmem:[%s201 + $0x38] sm:$0xff]
        %v496 = vld [vmem:[%s201 + $0x60] sm:$0xff]
        %v497 = vld [vmem:[%s201 + $0x68] sm:$0xff]
        %v498 = vunpack.c.l.bf16 %v492
        %v499 = vunpack.c.h.bf16 %v492
        %v500 = vunpack.c.l.bf16 %v493
        %v501 = vunpack.c.h.bf16 %v493
        %v502 = vunpack.c.l.bf16 %v494
        %v503 = vunpack.c.h.bf16 %v494
        %v504 = vunpack.c.l.bf16 %v495
        %v505 = vunpack.c.h.bf16 %v495
        %v506 = vunpack.c.l.bf16 %v496
        %v507 = vunpack.c.h.bf16 %v496
        %v508 = vunpack.c.l.bf16 %v497
        %v509 = vunpack.c.h.bf16 %v497
        %v510 = vmul.f32 %v498, %v488
        %v511 = vmul.f32 %v499, %v489
        %v512 = vmul.f32 %v500, %v490
        %v513 = vmul.f32 %v501, %v491
        %v514 = vmul.f32 %v502, %v488
        %v515 = vmul.f32 %v503, %v489
        %v516 = vmul.f32 %v504, %v490
        %v517 = vmul.f32 %v505, %v491
        %v518 = vmul.f32 %v506, %v488
        %v519 = vmul.f32 %v507, %v489
        %v520 = vmul.f32 %v508, %v490
        %v521 = vmul.f32 %v509, %v491
        %v522 = vadd.f32 %v510, %v512
        %v523 = vrot.slane %v522, 4
        %v524 = vadd.f32 %v522, %v523
        %v525 = vrot.slane %v524, 2
        %v526 = vadd.f32 %v524, %v525
        %v527 = vrot.slane %v526, 1
        %v528 = vadd.f32 %v526, %v527
        %v529 = vadd.f32 %v511, %v513
        %v530 = vrot.slane %v529, 4
        %v531 = vadd.f32 %v529, %v530
        %v532 = vrot.slane %v531, 2
        %v533 = vadd.f32 %v531, %v532
        %v534 = vrot.slane %v533, 1
        %v535 = vadd.f32 %v533, %v534
        %v536 = vadd.f32 %v514, %v516
        %v537 = vrot.slane %v536, 4
        %v538 = vadd.f32 %v536, %v537
        %v539 = vrot.slane %v538, 2
        %v540 = vadd.f32 %v538, %v539
        %v541 = vrot.slane %v540, 1
        %v542 = vadd.f32 %v540, %v541
        %v543 = vadd.f32 %v515, %v517
        %v544 = vrot.slane %v543, 4
        %v545 = vadd.f32 %v543, %v544
        %v546 = vrot.slane %v545, 2
        %v547 = vadd.f32 %v545, %v546
        %v548 = vrot.slane %v547, 1
        %v549 = vadd.f32 %v547, %v548
        %v550 = vadd.f32 %v518, %v520
        %v551 = vrot.slane %v550, 4
        %v552 = vadd.f32 %v550, %v551
        %v553 = vrot.slane %v552, 2
        %v554 = vadd.f32 %v552, %v553
        %v555 = vrot.slane %v554, 1
        %v556 = vadd.f32 %v554, %v555
        %v557 = vadd.f32 %v519, %v521
        %v558 = vrot.slane %v557, 4
        %v559 = vadd.f32 %v557, %v558
        %v560 = vrot.slane %v559, 2
        %v561 = vadd.f32 %v559, %v560
        %v562 = vrot.slane %v561, 1
        %v563 = vadd.f32 %v561, %v562
        %v564 = vadd.f32 %v528, 0.0
        %v565 = vadd.f32 %v535, 0.0
        %v566 = vadd.f32 %v542, 0.0
        %v567 = vadd.f32 %v549, 0.0
        %v568 = vadd.f32 %v556, 0.0
        %v569 = vadd.f32 %v563, 0.0
        %s570 = sadd.s32 %s280, 12
        %s571 = smul.addr %s570, 4
        %s572 = scalar_lea.vmem %s178, %s571
        %v573 = vld [vmem:[%s572] sm:$0xff]
        %v574 = vld [vmem:[%s572 + $0x8] sm:$0xff]
        %v575 = vunpack.c.l.bf16 %v573
        %v576 = vunpack.c.h.bf16 %v573
        %v577 = vunpack.c.l.bf16 %v574
        %v578 = vunpack.c.h.bf16 %v574
        %v579 = vld [vmem:[%s290] sm:$0xff]
        %v580 = vld [vmem:[%s290 + $0x8] sm:$0xff]
        %v581 = vld [vmem:[%s290 + $0x30] sm:$0xff]
        %v582 = vld [vmem:[%s290 + $0x38] sm:$0xff]
        %v583 = vld [vmem:[%s290 + $0x60] sm:$0xff]
        %v584 = vld [vmem:[%s290 + $0x68] sm:$0xff]
        %v585 = vunpack.c.l.bf16 %v579
        %v586 = vunpack.c.h.bf16 %v579
        %v587 = vunpack.c.l.bf16 %v580
        %v588 = vunpack.c.h.bf16 %v580
        %v589 = vunpack.c.l.bf16 %v581
        %v590 = vunpack.c.h.bf16 %v581
        %v591 = vunpack.c.l.bf16 %v582
        %v592 = vunpack.c.h.bf16 %v582
        %v593 = vunpack.c.l.bf16 %v583
        %v594 = vunpack.c.h.bf16 %v583
        %v595 = vunpack.c.l.bf16 %v584
        %v596 = vunpack.c.h.bf16 %v584
        %v597 = vmul.f32 %v585, %v575
        %v598 = vmul.f32 %v586, %v576
        %v599 = vmul.f32 %v587, %v577
        %v600 = vmul.f32 %v588, %v578
        %v601 = vmul.f32 %v589, %v575
        %v602 = vmul.f32 %v590, %v576
        %v603 = vmul.f32 %v591, %v577
        %v604 = vmul.f32 %v592, %v578
        %v605 = vmul.f32 %v593, %v575
        %v606 = vmul.f32 %v594, %v576
        %v607 = vmul.f32 %v595, %v577
        %v608 = vmul.f32 %v596, %v578
        %v609 = vadd.f32 %v597, %v599
        %v610 = vrot.slane %v609, 4
        %v611 = vadd.f32 %v609, %v610
        %v612 = vrot.slane %v611, 2
        %v613 = vadd.f32 %v611, %v612
        %v614 = vrot.slane %v613, 1
        %v615 = vadd.f32 %v613, %v614
        %v616 = vadd.f32 %v598, %v600
        %v617 = vrot.slane %v616, 4
        %v618 = vadd.f32 %v616, %v617
        %v619 = vrot.slane %v618, 2
        %v620 = vadd.f32 %v618, %v619
        %v621 = vrot.slane %v620, 1
        %v622 = vadd.f32 %v620, %v621
        %v623 = vadd.f32 %v601, %v603
        %v624 = vrot.slane %v623, 4
        %v625 = vadd.f32 %v623, %v624
        %v626 = vrot.slane %v625, 2
        %v627 = vadd.f32 %v625, %v626
        %v628 = vrot.slane %v627, 1
        %v629 = vadd.f32 %v627, %v628
        %v630 = vadd.f32 %v602, %v604
        %v631 = vrot.slane %v630, 4
        %v632 = vadd.f32 %v630, %v631
        %v633 = vrot.slane %v632, 2
        %v634 = vadd.f32 %v632, %v633
        %v635 = vrot.slane %v634, 1
        %v636 = vadd.f32 %v634, %v635
        %v637 = vadd.f32 %v605, %v607
        %v638 = vrot.slane %v637, 4
        %v639 = vadd.f32 %v637, %v638
        %v640 = vrot.slane %v639, 2
        %v641 = vadd.f32 %v639, %v640
        %v642 = vrot.slane %v641, 1
        %v643 = vadd.f32 %v641, %v642
        %v644 = vadd.f32 %v606, %v608
        %v645 = vrot.slane %v644, 4
        %v646 = vadd.f32 %v644, %v645
        %v647 = vrot.slane %v646, 2
        %v648 = vadd.f32 %v646, %v647
        %v649 = vrot.slane %v648, 1
        %v650 = vadd.f32 %v648, %v649
        %v651 = vadd.f32 %v564, %v615
        %v652 = vadd.f32 %v565, %v622
        %v653 = vadd.f32 %v566, %v629
        %v654 = vadd.f32 %v567, %v636
        %v655 = vadd.f32 %v568, %v643
        %v656 = vadd.f32 %v569, %v650
        %s657 = sadd.s32 %s369, 12
        %s658 = smul.addr %s657, 4
        %s659 = scalar_lea.vmem %s178, %s658
        %v660 = vld [vmem:[%s659] sm:$0xff]
        %v661 = vld [vmem:[%s659 + $0x8] sm:$0xff]
        %v662 = vunpack.c.l.bf16 %v660
        %v663 = vunpack.c.h.bf16 %v660
        %v664 = vunpack.c.l.bf16 %v661
        %v665 = vunpack.c.h.bf16 %v661
        %v666 = vld [vmem:[%s379] sm:$0xff]
        %v667 = vld [vmem:[%s379 + $0x8] sm:$0xff]
        %v668 = vld [vmem:[%s379 + $0x30] sm:$0xff]
        %v669 = vld [vmem:[%s379 + $0x38] sm:$0xff]
        %v670 = vld [vmem:[%s379 + $0x60] sm:$0xff]
        %v671 = vld [vmem:[%s379 + $0x68] sm:$0xff]
        %v672 = vunpack.c.l.bf16 %v666
        %v673 = vunpack.c.h.bf16 %v666
        %v674 = vunpack.c.l.bf16 %v667
        %v675 = vunpack.c.h.bf16 %v667
        %v676 = vunpack.c.l.bf16 %v668
        %v677 = vunpack.c.h.bf16 %v668
        %v678 = vunpack.c.l.bf16 %v669
        %v679 = vunpack.c.h.bf16 %v669
        %v680 = vunpack.c.l.bf16 %v670
        %v681 = vunpack.c.h.bf16 %v670
        %v682 = vunpack.c.l.bf16 %v671
        %v683 = vunpack.c.h.bf16 %v671
        %v684 = vmul.f32 %v672, %v662
        %v685 = vmul.f32 %v673, %v663
        %v686 = vmul.f32 %v674, %v664
        %v687 = vmul.f32 %v675, %v665
        %v688 = vmul.f32 %v676, %v662
        %v689 = vmul.f32 %v677, %v663
        %v690 = vmul.f32 %v678, %v664
        %v691 = vmul.f32 %v679, %v665
        %v692 = vmul.f32 %v680, %v662
        %v693 = vmul.f32 %v681, %v663
        %v694 = vmul.f32 %v682, %v664
        %v695 = vmul.f32 %v683, %v665
        %v696 = vadd.f32 %v684, %v686
        %v697 = vrot.slane %v696, 4
        %v698 = vadd.f32 %v696, %v697
        %v699 = vrot.slane %v698, 2
        %v700 = vadd.f32 %v698, %v699
        %v701 = vrot.slane %v700, 1
        %v702 = vadd.f32 %v700, %v701
        %v703 = vadd.f32 %v685, %v687
        %v704 = vrot.slane %v703, 4
        %v705 = vadd.f32 %v703, %v704
        %v706 = vrot.slane %v705, 2
        %v707 = vadd.f32 %v705, %v706
        %v708 = vrot.slane %v707, 1
        %v709 = vadd.f32 %v707, %v708
        %v710 = vadd.f32 %v688, %v690
        %v711 = vrot.slane %v710, 4
        %v712 = vadd.f32 %v710, %v711
        %v713 = vrot.slane %v712, 2
        %v714 = vadd.f32 %v712, %v713
        %v715 = vrot.slane %v714, 1
        %v716 = vadd.f32 %v714, %v715
        %v717 = vadd.f32 %v689, %v691
        %v718 = vrot.slane %v717, 4
        %v719 = vadd.f32 %v717, %v718
        %v720 = vrot.slane %v719, 2
        %v721 = vadd.f32 %v719, %v720
        %v722 = vrot.slane %v721, 1
        %v723 = vadd.f32 %v721, %v722
        %v724 = vadd.f32 %v692, %v694
        %v725 = vrot.slane %v724, 4
        %v726 = vadd.f32 %v724, %v725
        %v727 = vrot.slane %v726, 2
        %v728 = vadd.f32 %v726, %v727
        %v729 = vrot.slane %v728, 1
        %v730 = vadd.f32 %v728, %v729
        %v731 = vadd.f32 %v693, %v695
        %v732 = vrot.slane %v731, 4
        %v733 = vadd.f32 %v731, %v732
        %v734 = vrot.slane %v733, 2
        %v735 = vadd.f32 %v733, %v734
        %v736 = vrot.slane %v735, 1
        %v737 = vadd.f32 %v735, %v736
        %v738 = vadd.f32 %v651, %v702
        %v739 = vadd.f32 %v652, %v709
        %v740 = vadd.f32 %v653, %v716
        %v741 = vadd.f32 %v654, %v723
        %v742 = vadd.f32 %v655, %v730
        %v743 = vadd.f32 %v656, %v737
        %v750 = vrot.slane %v739, 4
        %v751 = vrot.slane %v741, 4
        %v752 = vrot.slane %v743, 4
        %v753 = vsel %vm467, %v738, %v750
        %v754 = vsel %vm467, %v740, %v751
        %v755 = vsel %vm467, %v742, %v752
        %v756 = vrot.slane %v754, 7
        %v757 = vsel %vm472, %v756, %v753
        %v758 = vsel %vm474, %v756, %v757
        %v759 = vrot.slane %v755, 6
        %v760 = vsel %vm477, %v759, %v758
        %v761 = vsel %vm479, %v759, %v760
        %s763 = scalar_lea.vmem %s173, 8 [#allocation2]
        %764 = vst [vmem:[%s763] sm:$0x77] %v761
        %s765 = sand.u32 %s89, 1
        %s766 = sand.u32 %s89, 1
        %s767 = smul.addr %s766, 16
        %s768 = scalar_lea.vmem [#allocation2], %s767
        // Predicated region
        $region29: #{meta_upscale.1} parent=27 // pred_check
          %p769 = pneg %p99
        $region30: #{meta_upscale.1} parent=27 // pred_check_branch
          %771 = sbr.rel (%p769) target = $region32
        $region31: #{meta_upscale.1} parent=27 // pred_region
          %s772 = smul.u32 2, %s17
          %s773 = smul.addr %s18, 2
          %s774 = sadd.s32 %s772, %s773
          %s775 = smul.addr %s774, 4
          %s776 = scalar_lea.vmem %s2, %s775
          // Predicated region
          $region33: #{meta_upscale.1} parent=31 // pred_check
            _
          $region34: #{meta_upscale.1} parent=31 // pred_check_branch
            %778 = sbr.rel (0) target = $region36
          $region35: #{meta_upscale.1} parent=31 // pred_region
            // Predicated region
            $region37: #{meta_upscale.1} parent=35 // pred_check
              _
            $region38: #{meta_upscale.1} parent=35 // pred_check_branch
              %780 = sbr.rel (0) target = $region40
            $region39: #{meta_upscale.1} parent=35 // pred_region
              // Predicated region
              $region52: #{meta_upscale.1} parent=39 // pred_check
                _
              $region53: #{meta_upscale.1} parent=39 // pred_check_branch
                %798 = sbr.rel (0) target = $region55
              $region54: #{meta_upscale.1} parent=39 // pred_region
                loop: start=0, step=1, limit=1
                $region56: #{meta_upscale.1} parent=54 // loop_pre_header
                  _
                $region57: #{meta_upscale.1} parent=54 // loop_header
                  %s800 = sphi 0, %s804
                  %p801 = scmp.ge.s32.totalorder %s800, 1
                  %s805 = sphi %s768, %s768
                  %s806 = sphi %s776, %s776
                $region58: #{meta_upscale.1} parent=54 // loop_header_branch
                  %803 = sbr.rel (%p801) target = $region62
                $region59: #{meta_upscale.1} parent=54 // loop_body
                  %v807 = vld [vmem:[%s805] sm:$0xff]
                  %808 = vst [vmem:[%s806] sm:$0xff] %v807
                  %v809 = vld [vmem:[%s805 + $0x8] sm:$0xff]
                  %810 = vst [vmem:[%s806 + $0x20] sm:$0xff] %v809
                $region60: #{meta_upscale.1} parent=54 // loop_footer
                  %s804 = sadd.s32 1, %s800
                $region61: #{meta_upscale.1} parent=54 // loop_footer_branch
                  %799 = sbr.rel target = $region57
                $region62: #{meta_upscale.1} parent=54 // loop_exit
                  _
              $region55: #{meta_upscale.1} parent=39 // pred_fallthru
                _
              // Predicated region
              $region63: #{meta_upscale.1} parent=39 // pred_check
                _
              $region64: #{meta_upscale.1} parent=39 // pred_check_branch
                %812 = sbr.rel target = $region66
              $region65: #{meta_upscale.1} parent=39 // pred_region
                _
              $region66: #{meta_upscale.1} parent=39 // pred_fallthru
                _
            $region40: #{meta_upscale.1} parent=35 // pred_fallthru
              _
            // Predicated region
            $region41: #{meta_upscale.1} parent=35 // pred_check
              _
            $region42: #{meta_upscale.1} parent=35 // pred_check_branch
              %782 = sbr.rel target = $region44
            $region43: #{meta_upscale.1} parent=35 // pred_region
              %s784 = ssub.s32 256, 1
              loop: start=0, step=1, limit=1
              $region45: #{meta_upscale.1} parent=43 // loop_pre_header
                _
              $region46: #{meta_upscale.1} parent=43 // loop_header
                %s786 = sphi 0, %s790
                %p787 = scmp.ge.s32.totalorder %s786, 1
                %s791 = sphi %s768, %s768
                %s792 = sphi %s776, %s776
              $region47: #{meta_upscale.1} parent=43 // loop_header_branch
                %789 = sbr.rel (%p787) target = $region51
              $region48: #{meta_upscale.1} parent=43 // loop_body
                %v793 = vld [vmem:[%s791] sm:%s784]
                %794 = vst [vmem:[%s792] sm:%s784] %v793
                %v795 = vld [vmem:[%s791 + $0x8] sm:%s784]
                %796 = vst [vmem:[%s792 + $0x20] sm:%s784] %v795
              $region49: #{meta_upscale.1} parent=43 // loop_footer
                %s790 = sadd.s32 1, %s786
              $region50: #{meta_upscale.1} parent=43 // loop_footer_branch
                %785 = sbr.rel target = $region46
              $region51: #{meta_upscale.1} parent=43 // loop_exit
                _
            $region44: #{meta_upscale.1} parent=35 // pred_fallthru
              _
          $region36: #{meta_upscale.1} parent=31 // pred_fallthru
            _
          %813 = vnop
        $region32: #{meta_upscale.1} parent=27 // pred_fallthru
          _
      $region28: #{meta_upscale.1} parent=5 // pred_fallthru
        _
      %p814 = scmp.le.s32.totalorder 2, %s8
      // Predicated region
      $region67: #{meta_upscale.1} parent=5 // pred_check
        %p815 = pneg %p814
      $region68: #{meta_upscale.1} parent=5 // pred_check_branch
        %817 = sbr.rel (%p815) target = $region70
      $region69: #{meta_upscale.1} parent=5 // pred_region
        %s818 = ssub.s32 %s8, 2
        // Predicated region
        $region71: #{meta_upscale.1} parent=69 // pred_check
          %p819 = pneg %p105
        $region72: #{meta_upscale.1} parent=69 // pred_check_branch
          %821 = sbr.rel (%p819) target = $region74
        $region73: #{meta_upscale.1} parent=69 // pred_region
          %s822 = sand.u32 %s90, 1
          %s823 = sand.u32 %s90, 1
          %s824 = smul.addr %s823, 16
          %s825 = scalar_lea.vmem [#allocation2], %s824
        $region74: #{meta_upscale.1} parent=69 // pred_fallthru
          _
      $region70: #{meta_upscale.1} parent=5 // pred_fallthru
        _
    $region6: #{meta_upscale.1} parent=1 // loop_footer
      %s12 = sadd.s32 1, %s8
    $region7: #{meta_upscale.1} parent=1 // loop_footer_branch
      %7 = sbr.rel target = $region3
    $region8: #{meta_upscale.1} parent=1 // loop_exit
      _

</llo_original>
